<compile_context>
chip_gen: v7x
topology: tpu7x:2x2x1
jax: 0.10.0
libtpu: 0.0.40
codegen_flags: <defaults>
</compile_context>

<pallas_src>
import jax
import jax.numpy as jnp
from jax import lax
from jax.experimental import pallas as pl
from jax.experimental.pallas import tpu as pltpu


def _make_cloth_kernel(BS, H, W, C, CIN_PAD):
    N = H * W                          # lanes per image
    BN = BS * N                        # total lanes (batch folded into lanes)
    PAD = W + 1                        # widest tap shift is +/- (W + 1)
    CIN = 2 * C + 3
    taps = [(ky - 1, kx - 1) for ky in range(3) for kx in range(3)]

    def kernel(logp_ref, x_ref, w2_ref, bias_ref, o_ref):
        """Single-invocation kernel over the whole batch.

        logp_ref : SMEM (BS, 3)          [log(stiff), log(shear), log(bend)]
        x_ref    : VMEM (BS, C, N)       velocity field, spatial in lanes
        w2_ref   : VMEM (3, 9*CIN_PAD)   fused 3x3 conv weights
        bias_ref : VMEM (3, 1)
        o_ref    : VMEM (BS, 3, N)
        """
        # --- per-tap SAME-padding masks on the global (batched) lane index ---
        pos = lax.broadcasted_iota(jnp.int32, (1, BN), 1)
        pin = pos % N                                  # position within image
        col = pos % W                                  # column within image
        ok_up = pin >= W                               # row-1 in bounds
        ok_dn = pin < N - W                            # row+1 in bounds
        ok_lt = col >= 1                               # col-1 in bounds
        ok_rt = col < W - 1                            # col+1 in bounds

        # per-image last-column mask for dj
        pos1 = lax.broadcasted_iota(jnp.int32, (1, N), 1)
        ok_rt1 = (pos1 % W) < W - 1

        # --- build the (CIN_PAD, BN) feature slab: [di, dj, ls, lh, lb, 0pad] ---
        feat_parts = []
        for b in range(BS):                            # static, tiny batch
            xb = x_ref[b]                              # (C, N) f32
            # finite differences as lane shifts; di's zero rows are exactly the
            # last W lanes of the image, dj masks the last column of each row.
            di = jnp.concatenate(
                [xb[:, W:] - xb[:, :N - W], jnp.zeros((C, W), jnp.float32)],
                axis=1)
            dj_raw = jnp.concatenate(
                [xb[:, 1:] - xb[:, :N - 1], jnp.zeros((C, 1), jnp.float32)],
                axis=1)
            dj = jnp.where(ok_rt1, dj_raw, 0.0)
            rows = [di, dj,
                    jnp.full((1, N), logp_ref[b, 0], jnp.float32),
                    jnp.full((1, N), logp_ref[b, 1], jnp.float32),
                    jnp.full((1, N), logp_ref[b, 2], jnp.float32)]
            if CIN_PAD > CIN:
                rows.append(jnp.zeros((CIN_PAD - CIN, N), jnp.float32))
            feat_parts.append(jnp.concatenate(rows, axis=0))   # (CIN_PAD, N)
        feat = (feat_parts[0] if BS == 1
                else jnp.concatenate(feat_parts, axis=1))      # (CIN_PAD, BN)

        # zero-pad once along lanes; each conv tap becomes a static lane slice.
        zp = jnp.zeros((CIN_PAD, PAD), jnp.float32)
        featw = jnp.concatenate([zp, feat, zp], axis=1)        # (CIN_PAD, BN+2*PAD)

        pieces = []
        for dy, dx in taps:
            off = PAD + dy * W + dx                    # static, >= 0
            piece = featw[:, off:off + BN]             # feat shifted by (dy, dx)
            conds = []
            if dy == -1:
                conds.append(ok_up)
            elif dy == 1:
                conds.append(ok_dn)
            if dx == -1:
                conds.append(ok_lt)
            elif dx == 1:
                conds.append(ok_rt)
            if conds:
                m = conds[0]
                for cnd in conds[1:]:
                    m = m & cnd
                # zeroes both SAME padding AND cross-image contamination
                piece = jnp.where(m, piece, 0.0)
            pieces.append(piece)
        # 8-aligned sublane stacking (CIN_PAD is a multiple of 8)
        stacked = jnp.concatenate(pieces, axis=0)      # (9*CIN_PAD, BN)

        # one fused MXU matmul over the whole batch (lane-dense N = BS*H*W)
        acc = jnp.dot(w2_ref[...], stacked,
                      preferred_element_type=jnp.float32)      # (3, BN)
        acc = acc + bias_ref[...]                      # (3, 1) broadcast

        # squash: 10 * tanh(x / 10)  (mul, not div; tanh rides the idle EUP)
        y = (10.0 * jnp.tanh(acc * 0.1)).astype(o_ref.dtype)   # (3, BN)

        # lane-aligned per-batch slab stores (N is a multiple of 128 here)
        for b in range(BS):
            o_ref[b] = y[:, b * N:(b + 1) * N]

    return kernel


def cloth_net_param_forward(x_v, stiffnesses, shearings, bendings,
                            conv_w, conv_b):
    """x_v: (bs, c, h, w) NCHW; stiff/shear/bend: (bs,) positive scalars.

    conv_w: (3, 3, 2c+3, 3) HWIO weights of the 3x3 SAME conv head,
    conv_b: (3,).  Returns (bs, 3, h, w) like the PyTorch module.
    """
    bs, c, h, w = x_v.shape
    n = h * w
    cin = 2 * c + 3
    cin_pad = ((cin + 7) // 8) * 8            # 8-aligned K block per tap

    # NCHW is already channel-major / spatial-in-lanes: just flatten H*W.
    x_flat = x_v.reshape(bs, c, n).astype(jnp.float32)
    logp = jnp.stack([jnp.log(stiffnesses), jnp.log(shearings),
                      jnp.log(bendings)], axis=-1).astype(jnp.float32)  # (bs, 3)

    # (3,3,cin,3) HWIO -> (3, 9*cin_pad), w2[o, t*cin_pad + k] = w[ky,kx,k,o]
    w_t = jnp.transpose(conv_w.astype(jnp.float32), (0, 1, 3, 2))       # [ky,kx,o,k]
    w_t = jnp.pad(w_t, ((0, 0), (0, 0), (0, 0), (0, cin_pad - cin)))
    w2 = jnp.transpose(w_t.reshape(9, 3, cin_pad), (1, 0, 2)).reshape(
        3, 9 * cin_pad)
    bias2 = conv_b.reshape(3, 1).astype(jnp.float32)

    kernel = _make_cloth_kernel(bs, h, w, c, cin_pad)
    out_flat = pl.pallas_call(
        kernel,
        out_shape=jax.ShapeDtypeStruct((bs, 3, n), jnp.float32),
        in_specs=[
            pl.BlockSpec(memory_space=pltpu.MemorySpace.SMEM),   # logp (bs,3)
            pl.BlockSpec(memory_space=pltpu.MemorySpace.VMEM),   # x_v flat
            pl.BlockSpec(memory_space=pltpu.MemorySpace.VMEM),   # fused conv W
            pl.BlockSpec(memory_space=pltpu.MemorySpace.VMEM),   # bias
        ],
        out_specs=pl.BlockSpec(memory_space=pltpu.MemorySpace.VMEM),
    )(logp, x_flat, w2, bias2)

    return out_flat.reshape(bs, 3, h, w)                # already NCHW


def _reference(x_v, st, sh, be, conv_w, conv_b):
    """Pure-JAX reference mirroring the PyTorch forward (with the conv head)."""
    bs, c, h, w = x_v.shape
    di = jnp.concatenate([x_v[:, :, 1:] - x_v[:, :, :-1],
                          jnp.zeros((bs, c, 1, w), x_v.dtype)], axis=2)
    dj = jnp.concatenate([x_v[:, :, :, 1:] - x_v[:, :, :, :-1],
                          jnp.zeros((bs, c, h, 1), x_v.dtype)], axis=3)
    ones = jnp.ones((1, 1, h, w), x_v.dtype)
    x = jnp.concatenate([di, dj,
                         jnp.log(st)[:, None, None, None] * ones,
                         jnp.log(sh)[:, None, None, None] * ones,
                         jnp.log(be)[:, None, None, None] * ones], axis=1)
    x_nhwc = jnp.transpose(x, (0, 2, 3, 1))
    y = lax.conv_general_dilated(
        x_nhwc, conv_w, window_strides=(1, 1), padding="SAME",
        dimension_numbers=("NHWC", "HWIO", "NHWC")) + conv_b
    y = jnp.transpose(y, (0, 3, 1, 2))
    return 10.0 * jnp.tanh(y / 10.0)


if __name__ == "__main__":
    key = jax.random.PRNGKey(0)
    k_x, k_s, k_h, k_b, k_w, k_bias = jax.random.split(key, 6)

    bs, c, h, w = 2, 6, 16, 16          # c=6 -> di+dj+3 params = 15 in-channels
    x_v = jax.random.normal(k_x, (bs, c, h, w), jnp.float32)
    stiffnesses = jax.random.uniform(k_s, (bs,), jnp.float32, 0.5, 2.0)
    shearings   = jax.random.uniform(k_h, (bs,), jnp.float32, 0.5, 2.0)
    bendings    = jax.random.uniform(k_b, (bs,), jnp.float32, 0.5, 2.0)

    cin = 2 * c + 3
    conv_w = 0.1 * jax.random.normal(k_w, (3, 3, cin, 3), jnp.float32)  # HWIO
    conv_b = 0.1 * jax.random.normal(k_bias, (3,), jnp.float32)

    out = cloth_net_param_forward(x_v, stiffnesses, shearings, bendings,
                                  conv_w, conv_b)
    out = jax.block_until_ready(out)

    ref = _reference(x_v, stiffnesses, shearings, bendings, conv_w, conv_b)
    assert out.shape == (bs, 3, h, w), out.shape
    assert jnp.allclose(out, ref, rtol=1e-3, atol=1e-3), (
        float(jnp.max(jnp.abs(out - ref))))
    print("KERNEL_OK")
</pallas_src>

<mosaic_0001>
module attributes {stable_mosaic.version = 11 : i64} {
  func.func @kernel(%arg0: memref<2x3xf32, #tpu.memory_space<smem>>, %arg1: memref<2x6x256xf32, #tpu.memory_space<vmem>>, %arg2: memref<3x144xf32, #tpu.memory_space<vmem>>, %arg3: memref<3x1xf32, #tpu.memory_space<vmem>>, %arg4: memref<2x3x256xf32, #tpu.memory_space<vmem>>) attributes {dimension_semantics = [], scalar_prefetch = 0 : i64, scratch_operands = 0 : i64, tpu.core_type = #tpu.core_type<tc>} {
    %0 = tpu.iota {dimensions = array<i32: 1>} : vector<1x512xi32>
    %c256_i32 = arith.constant 256 : i32
    %c0_i32 = arith.constant 0 : i32
    %1 = arith.cmpi eq, %c256_i32, %c0_i32 : i32
    %c1_i32 = arith.constant 1 : i32
    %2 = arith.select %1, %c1_i32, %c256_i32 : i32
    %3 = vector.broadcast %2 : i32 to vector<1x512xi32>
    %4 = arith.remsi %0, %3 : vector<1x512xi32>
    %c0_i32_0 = arith.constant 0 : i32
    %5 = vector.broadcast %c0_i32_0 : i32 to vector<1x512xi32>
    %6 = arith.cmpi ne, %4, %5 : vector<1x512xi32>
    %c0_i32_1 = arith.constant 0 : i32
    %7 = vector.broadcast %c0_i32_1 : i32 to vector<1x512xi32>
    %8 = arith.cmpi slt, %4, %7 : vector<1x512xi32>
    %c0_i32_2 = arith.constant 0 : i32
    %9 = arith.cmpi slt, %2, %c0_i32_2 : i32
    %10 = vector.broadcast %9 : i1 to vector<1x512xi1>
    %11 = vector.broadcast %10 : vector<1x512xi1> to vector<1x512xi1>
    %12 = arith.xori %8, %11 : vector<1x512xi1>
    %13 = arith.andi %12, %6 : vector<1x512xi1>
    %14 = vector.broadcast %2 : i32 to vector<1x512xi32>
    %15 = arith.addi %4, %14 : vector<1x512xi32>
    %16 = arith.select %13, %15, %4 : vector<1x512xi1>, vector<1x512xi32>
    %c16_i32 = arith.constant 16 : i32
    %c0_i32_3 = arith.constant 0 : i32
    %17 = arith.cmpi eq, %c16_i32, %c0_i32_3 : i32
    %c1_i32_4 = arith.constant 1 : i32
    %18 = arith.select %17, %c1_i32_4, %c16_i32 : i32
    %19 = vector.broadcast %18 : i32 to vector<1x512xi32>
    %20 = arith.remsi %0, %19 : vector<1x512xi32>
    %c0_i32_5 = arith.constant 0 : i32
    %21 = vector.broadcast %c0_i32_5 : i32 to vector<1x512xi32>
    %22 = arith.cmpi ne, %20, %21 : vector<1x512xi32>
    %c0_i32_6 = arith.constant 0 : i32
    %23 = vector.broadcast %c0_i32_6 : i32 to vector<1x512xi32>
    %24 = arith.cmpi slt, %20, %23 : vector<1x512xi32>
    %c0_i32_7 = arith.constant 0 : i32
    %25 = arith.cmpi slt, %18, %c0_i32_7 : i32
    %26 = vector.broadcast %25 : i1 to vector<1x512xi1>
    %27 = vector.broadcast %26 : vector<1x512xi1> to vector<1x512xi1>
    %28 = arith.xori %24, %27 : vector<1x512xi1>
    %29 = arith.andi %28, %22 : vector<1x512xi1>
    %30 = vector.broadcast %18 : i32 to vector<1x512xi32>
    %31 = arith.addi %20, %30 : vector<1x512xi32>
    %32 = arith.select %29, %31, %20 : vector<1x512xi1>, vector<1x512xi32>
    %c16_i32_8 = arith.constant 16 : i32
    %33 = vector.broadcast %c16_i32_8 : i32 to vector<1x512xi32>
    %34 = arith.cmpi sge, %16, %33 : vector<1x512xi32>
    %c240_i32 = arith.constant 240 : i32
    %35 = vector.broadcast %c240_i32 : i32 to vector<1x512xi32>
    %36 = arith.cmpi slt, %16, %35 : vector<1x512xi32>
    %c1_i32_9 = arith.constant 1 : i32
    %37 = vector.broadcast %c1_i32_9 : i32 to vector<1x512xi32>
    %38 = arith.cmpi sge, %32, %37 : vector<1x512xi32>
    %c15_i32 = arith.constant 15 : i32
    %39 = vector.broadcast %c15_i32 : i32 to vector<1x512xi32>
    %40 = arith.cmpi slt, %32, %39 : vector<1x512xi32>
    %41 = tpu.iota {dimensions = array<i32: 1>} : vector<1x256xi32>
    %c16_i32_10 = arith.constant 16 : i32
    %c0_i32_11 = arith.constant 0 : i32
    %42 = arith.cmpi eq, %c16_i32_10, %c0_i32_11 : i32
    %c1_i32_12 = arith.constant 1 : i32
    %43 = arith.select %42, %c1_i32_12, %c16_i32_10 : i32
    %44 = vector.broadcast %43 : i32 to vector<1x256xi32>
    %45 = arith.remsi %41, %44 : vector<1x256xi32>
    %c0_i32_13 = arith.constant 0 : i32
    %46 = vector.broadcast %c0_i32_13 : i32 to vector<1x256xi32>
    %47 = arith.cmpi ne, %45, %46 : vector<1x256xi32>
    %c0_i32_14 = arith.constant 0 : i32
    %48 = vector.broadcast %c0_i32_14 : i32 to vector<1x256xi32>
    %49 = arith.cmpi slt, %45, %48 : vector<1x256xi32>
    %c0_i32_15 = arith.constant 0 : i32
    %50 = arith.cmpi slt, %43, %c0_i32_15 : i32
    %51 = vector.broadcast %50 : i1 to vector<1x256xi1>
    %52 = vector.broadcast %51 : vector<1x256xi1> to vector<1x256xi1>
    %53 = arith.xori %49, %52 : vector<1x256xi1>
    %54 = arith.andi %53, %47 : vector<1x256xi1>
    %55 = vector.broadcast %43 : i32 to vector<1x256xi32>
    %56 = arith.addi %45, %55 : vector<1x256xi32>
    %57 = arith.select %54, %56, %45 : vector<1x256xi1>, vector<1x256xi32>
    %c15_i32_16 = arith.constant 15 : i32
    %58 = vector.broadcast %c15_i32_16 : i32 to vector<1x256xi32>
    %59 = arith.cmpi slt, %57, %58 : vector<1x256xi32>
    %c0 = arith.constant 0 : index
    %c0_17 = arith.constant 0 : index
    %c0_18 = arith.constant 0 : index
    %60 = vector.load %arg1[%c0, %c0_17, %c0_18] : memref<2x6x256xf32, #tpu.memory_space<vmem>>, vector<1x6x256xf32>
    %61 = vector.shape_cast %60 : vector<1x6x256xf32> to vector<6x256xf32>
    %62 = vector.extract_strided_slice %61 {offsets = [0, 16], sizes = [6, 240], strides = [1, 1]} : vector<6x256xf32> to vector<6x240xf32>
    %63 = vector.extract_strided_slice %61 {offsets = [0, 0], sizes = [6, 240], strides = [1, 1]} : vector<6x256xf32> to vector<6x240xf32>
    %64 = arith.subf %62, %63 : vector<6x240xf32>
    %cst = arith.constant 0.000000e+00 : f32
    %65 = vector.broadcast %cst : f32 to vector<6x16xf32>
    %66 = tpu.concatenate %64, %65 in 1 : vector<6x240xf32>, vector<6x16xf32> -> vector<6x256xf32>
    %67 = vector.extract_strided_slice %61 {offsets = [0, 1], sizes = [6, 255], strides = [1, 1]} : vector<6x256xf32> to vector<6x255xf32>
    %68 = vector.extract_strided_slice %61 {offsets = [0, 0], sizes = [6, 255], strides = [1, 1]} : vector<6x256xf32> to vector<6x255xf32>
    %69 = arith.subf %67, %68 : vector<6x255xf32>
    %cst_19 = arith.constant 0.000000e+00 : f32
    %70 = vector.broadcast %cst_19 : f32 to vector<6x1xf32>
    %71 = tpu.concatenate %69, %70 in 1 : vector<6x255xf32>, vector<6x1xf32> -> vector<6x256xf32>
    %cst_20 = arith.constant 0.000000e+00 : f32
    %72 = vector.shape_cast %59 : vector<1x256xi1> to vector<1x256xi1>
    %73 = vector.broadcast %72 : vector<1x256xi1> to vector<6x256xi1>
    %74 = vector.broadcast %cst_20 : f32 to vector<6x256xf32>
    %75 = arith.select %73, %71, %74 : vector<6x256xi1>, vector<6x256xf32>
    %c0_21 = arith.constant 0 : index
    %c0_22 = arith.constant 0 : index
    %76 = memref.load %arg0[%c0_21, %c0_22] : memref<2x3xf32, #tpu.memory_space<smem>>
    %77 = vector.broadcast %76 : f32 to vector<1x256xf32>
    %c0_23 = arith.constant 0 : index
    %c1 = arith.constant 1 : index
    %78 = memref.load %arg0[%c0_23, %c1] : memref<2x3xf32, #tpu.memory_space<smem>>
    %79 = vector.broadcast %78 : f32 to vector<1x256xf32>
    %c0_24 = arith.constant 0 : index
    %c2 = arith.constant 2 : index
    %80 = memref.load %arg0[%c0_24, %c2] : memref<2x3xf32, #tpu.memory_space<smem>>
    %81 = vector.broadcast %80 : f32 to vector<1x256xf32>
    %cst_25 = arith.constant 0.000000e+00 : f32
    %82 = vector.broadcast %cst_25 : f32 to vector<1x256xf32>
    %83 = tpu.concatenate %66, %75, %77, %79, %81, %82 in 0 : vector<6x256xf32>, vector<6x256xf32>, vector<1x256xf32>, vector<1x256xf32>, vector<1x256xf32>, vector<1x256xf32> -> vector<16x256xf32>
    %c1_26 = arith.constant 1 : index
    %c0_27 = arith.constant 0 : index
    %c0_28 = arith.constant 0 : index
    %84 = vector.load %arg1[%c1_26, %c0_27, %c0_28] : memref<2x6x256xf32, #tpu.memory_space<vmem>>, vector<1x6x256xf32>
    %85 = vector.shape_cast %84 : vector<1x6x256xf32> to vector<6x256xf32>
    %86 = vector.extract_strided_slice %85 {offsets = [0, 16], sizes = [6, 240], strides = [1, 1]} : vector<6x256xf32> to vector<6x240xf32>
    %87 = vector.extract_strided_slice %85 {offsets = [0, 0], sizes = [6, 240], strides = [1, 1]} : vector<6x256xf32> to vector<6x240xf32>
    %88 = arith.subf %86, %87 : vector<6x240xf32>
    %cst_29 = arith.constant 0.000000e+00 : f32
    %89 = vector.broadcast %cst_29 : f32 to vector<6x16xf32>
    %90 = tpu.concatenate %88, %89 in 1 : vector<6x240xf32>, vector<6x16xf32> -> vector<6x256xf32>
    %91 = vector.extract_strided_slice %85 {offsets = [0, 1], sizes = [6, 255], strides = [1, 1]} : vector<6x256xf32> to vector<6x255xf32>
    %92 = vector.extract_strided_slice %85 {offsets = [0, 0], sizes = [6, 255], strides = [1, 1]} : vector<6x256xf32> to vector<6x255xf32>
    %93 = arith.subf %91, %92 : vector<6x255xf32>
    %cst_30 = arith.constant 0.000000e+00 : f32
    %94 = vector.broadcast %cst_30 : f32 to vector<6x1xf32>
    %95 = tpu.concatenate %93, %94 in 1 : vector<6x255xf32>, vector<6x1xf32> -> vector<6x256xf32>
    %cst_31 = arith.constant 0.000000e+00 : f32
    %96 = vector.shape_cast %59 : vector<1x256xi1> to vector<1x256xi1>
    %97 = vector.broadcast %96 : vector<1x256xi1> to vector<6x256xi1>
    %98 = vector.broadcast %cst_31 : f32 to vector<6x256xf32>
    %99 = arith.select %97, %95, %98 : vector<6x256xi1>, vector<6x256xf32>
    %c1_32 = arith.constant 1 : index
    %c0_33 = arith.constant 0 : index
    %100 = memref.load %arg0[%c1_32, %c0_33] : memref<2x3xf32, #tpu.memory_space<smem>>
    %101 = vector.broadcast %100 : f32 to vector<1x256xf32>
    %c1_34 = arith.constant 1 : index
    %c1_35 = arith.constant 1 : index
    %102 = memref.load %arg0[%c1_34, %c1_35] : memref<2x3xf32, #tpu.memory_space<smem>>
    %103 = vector.broadcast %102 : f32 to vector<1x256xf32>
    %c1_36 = arith.constant 1 : index
    %c2_37 = arith.constant 2 : index
    %104 = memref.load %arg0[%c1_36, %c2_37] : memref<2x3xf32, #tpu.memory_space<smem>>
    %105 = vector.broadcast %104 : f32 to vector<1x256xf32>
    %cst_38 = arith.constant 0.000000e+00 : f32
    %106 = vector.broadcast %cst_38 : f32 to vector<1x256xf32>
    %107 = tpu.concatenate %90, %99, %101, %103, %105, %106 in 0 : vector<6x256xf32>, vector<6x256xf32>, vector<1x256xf32>, vector<1x256xf32>, vector<1x256xf32>, vector<1x256xf32> -> vector<16x256xf32>
    %108 = tpu.concatenate %83, %107 in 1 : vector<16x256xf32>, vector<16x256xf32> -> vector<16x512xf32>
    %cst_39 = arith.constant 0.000000e+00 : f32
    %109 = vector.broadcast %cst_39 : f32 to vector<16x17xf32>
    %110 = tpu.concatenate %109, %108, %109 in 1 : vector<16x17xf32>, vector<16x512xf32>, vector<16x17xf32> -> vector<16x546xf32>
    %111 = vector.extract_strided_slice %110 {offsets = [0, 0], sizes = [16, 512], strides = [1, 1]} : vector<16x546xf32> to vector<16x512xf32>
    %112 = arith.andi %34, %38 : vector<1x512xi1>
    %cst_40 = arith.constant 0.000000e+00 : f32
    %113 = vector.shape_cast %112 : vector<1x512xi1> to vector<1x512xi1>
    %114 = vector.broadcast %113 : vector<1x512xi1> to vector<16x512xi1>
    %115 = vector.broadcast %cst_40 : f32 to vector<16x512xf32>
    %116 = arith.select %114, %111, %115 : vector<16x512xi1>, vector<16x512xf32>
    %117 = vector.extract_strided_slice %110 {offsets = [0, 1], sizes = [16, 512], strides = [1, 1]} : vector<16x546xf32> to vector<16x512xf32>
    %cst_41 = arith.constant 0.000000e+00 : f32
    %118 = vector.shape_cast %34 : vector<1x512xi1> to vector<1x512xi1>
    %119 = vector.broadcast %118 : vector<1x512xi1> to vector<16x512xi1>
    %120 = vector.broadcast %cst_41 : f32 to vector<16x512xf32>
    %121 = arith.select %119, %117, %120 : vector<16x512xi1>, vector<16x512xf32>
    %122 = vector.extract_strided_slice %110 {offsets = [0, 2], sizes = [16, 512], strides = [1, 1]} : vector<16x546xf32> to vector<16x512xf32>
    %123 = arith.andi %34, %40 : vector<1x512xi1>
    %cst_42 = arith.constant 0.000000e+00 : f32
    %124 = vector.shape_cast %123 : vector<1x512xi1> to vector<1x512xi1>
    %125 = vector.broadcast %124 : vector<1x512xi1> to vector<16x512xi1>
    %126 = vector.broadcast %cst_42 : f32 to vector<16x512xf32>
    %127 = arith.select %125, %122, %126 : vector<16x512xi1>, vector<16x512xf32>
    %128 = vector.extract_strided_slice %110 {offsets = [0, 16], sizes = [16, 512], strides = [1, 1]} : vector<16x546xf32> to vector<16x512xf32>
    %cst_43 = arith.constant 0.000000e+00 : f32
    %129 = vector.shape_cast %38 : vector<1x512xi1> to vector<1x512xi1>
    %130 = vector.broadcast %129 : vector<1x512xi1> to vector<16x512xi1>
    %131 = vector.broadcast %cst_43 : f32 to vector<16x512xf32>
    %132 = arith.select %130, %128, %131 : vector<16x512xi1>, vector<16x512xf32>
    %133 = vector.extract_strided_slice %110 {offsets = [0, 17], sizes = [16, 512], strides = [1, 1]} : vector<16x546xf32> to vector<16x512xf32>
    %134 = vector.extract_strided_slice %110 {offsets = [0, 18], sizes = [16, 512], strides = [1, 1]} : vector<16x546xf32> to vector<16x512xf32>
    %cst_44 = arith.constant 0.000000e+00 : f32
    %135 = vector.shape_cast %40 : vector<1x512xi1> to vector<1x512xi1>
    %136 = vector.broadcast %135 : vector<1x512xi1> to vector<16x512xi1>
    %137 = vector.broadcast %cst_44 : f32 to vector<16x512xf32>
    %138 = arith.select %136, %134, %137 : vector<16x512xi1>, vector<16x512xf32>
    %139 = vector.extract_strided_slice %110 {offsets = [0, 32], sizes = [16, 512], strides = [1, 1]} : vector<16x546xf32> to vector<16x512xf32>
    %140 = arith.andi %36, %38 : vector<1x512xi1>
    %cst_45 = arith.constant 0.000000e+00 : f32
    %141 = vector.shape_cast %140 : vector<1x512xi1> to vector<1x512xi1>
    %142 = vector.broadcast %141 : vector<1x512xi1> to vector<16x512xi1>
    %143 = vector.broadcast %cst_45 : f32 to vector<16x512xf32>
    %144 = arith.select %142, %139, %143 : vector<16x512xi1>, vector<16x512xf32>
    %145 = vector.extract_strided_slice %110 {offsets = [0, 33], sizes = [16, 512], strides = [1, 1]} : vector<16x546xf32> to vector<16x512xf32>
    %cst_46 = arith.constant 0.000000e+00 : f32
    %146 = vector.shape_cast %36 : vector<1x512xi1> to vector<1x512xi1>
    %147 = vector.broadcast %146 : vector<1x512xi1> to vector<16x512xi1>
    %148 = vector.broadcast %cst_46 : f32 to vector<16x512xf32>
    %149 = arith.select %147, %145, %148 : vector<16x512xi1>, vector<16x512xf32>
    %150 = vector.extract_strided_slice %110 {offsets = [0, 34], sizes = [16, 512], strides = [1, 1]} : vector<16x546xf32> to vector<16x512xf32>
    %151 = arith.andi %36, %40 : vector<1x512xi1>
    %cst_47 = arith.constant 0.000000e+00 : f32
    %152 = vector.shape_cast %151 : vector<1x512xi1> to vector<1x512xi1>
    %153 = vector.broadcast %152 : vector<1x512xi1> to vector<16x512xi1>
    %154 = vector.broadcast %cst_47 : f32 to vector<16x512xf32>
    %155 = arith.select %153, %150, %154 : vector<16x512xi1>, vector<16x512xf32>
    %156 = tpu.concatenate %116, %121, %127, %132, %133, %138, %144, %149, %155 in 0 : vector<16x512xf32>, vector<16x512xf32>, vector<16x512xf32>, vector<16x512xf32>, vector<16x512xf32>, vector<16x512xf32>, vector<16x512xf32>, vector<16x512xf32>, vector<16x512xf32> -> vector<144x512xf32>
    %c0_48 = arith.constant 0 : index
    %c0_49 = arith.constant 0 : index
    %157 = vector.load %arg2[%c0_48, %c0_49] : memref<3x144xf32, #tpu.memory_space<vmem>>, vector<3x144xf32>
    %cst_50 = arith.constant dense<0.000000e+00> : vector<3x512xf32>
    %158 = tpu.matmul %157, %156, %cst_50 {dimension_numbers = #tpu.dot_dimension_numbers<[1], [0], [0], [1], [0, 0, 1, 1], [], []>} : vector<3x144xf32>, vector<144x512xf32>, vector<3x512xf32> -> vector<3x512xf32>
    %c0_51 = arith.constant 0 : index
    %c0_52 = arith.constant 0 : index
    %159 = vector.load %arg3[%c0_51, %c0_52] : memref<3x1xf32, #tpu.memory_space<vmem>>, vector<3x1xf32>
    %160 = vector.broadcast %159 : vector<3x1xf32> to vector<3x512xf32>
    %161 = arith.addf %158, %160 : vector<3x512xf32>
    %cst_53 = arith.constant 1.000000e-01 : f32
    %162 = vector.broadcast %cst_53 : f32 to vector<3x512xf32>
    %163 = arith.mulf %161, %162 : vector<3x512xf32>
    %164 = math.tanh %163 : vector<3x512xf32>
    %cst_54 = arith.constant 1.000000e+01 : f32
    %165 = vector.broadcast %cst_54 : f32 to vector<3x512xf32>
    %166 = arith.mulf %165, %164 : vector<3x512xf32>
    %167 = vector.extract_strided_slice %166 {offsets = [0, 0], sizes = [3, 256], strides = [1, 1]} : vector<3x512xf32> to vector<3x256xf32>
    %c0_55 = arith.constant 0 : index
    %c0_56 = arith.constant 0 : index
    %c0_57 = arith.constant 0 : index
    %168 = vector.load %arg4[%c0_55, %c0_56, %c0_57] : memref<2x3x256xf32, #tpu.memory_space<vmem>>, vector<1x3x256xf32>
    %169 = vector.shape_cast %168 : vector<1x3x256xf32> to vector<3x256xf32>
    %170 = vector.shape_cast %167 : vector<3x256xf32> to vector<1x3x256xf32>
    tpu.vector_store %arg4[%c0_55, %c0_56, %c0_57], %170 {strides = array<i32>} : memref<2x3x256xf32, #tpu.memory_space<vmem>>, vector<1x3x256xf32>,
    %171 = vector.extract_strided_slice %166 {offsets = [0, 256], sizes = [3, 256], strides = [1, 1]} : vector<3x512xf32> to vector<3x256xf32>
    %c1_58 = arith.constant 1 : index
    %c0_59 = arith.constant 0 : index
    %c0_60 = arith.constant 0 : index
    %172 = vector.load %arg4[%c1_58, %c0_59, %c0_60] : memref<2x3x256xf32, #tpu.memory_space<vmem>>, vector<1x3x256xf32>
    %173 = vector.shape_cast %172 : vector<1x3x256xf32> to vector<3x256xf32>
    %174 = vector.shape_cast %171 : vector<3x256xf32> to vector<1x3x256xf32>
    tpu.vector_store %arg4[%c1_58, %c0_59, %c0_60], %174 {strides = array<i32>} : memref<2x3x256xf32, #tpu.memory_space<vmem>>, vector<1x3x256xf32>,
    return
  }
}

</mosaic_0001>

<llo_original>
// kernel: tpu_custom_call.1
$region0: #{tpu_custom_call.1}
  #allocation0 [shape = 'u32[]', space=smem, size = 0x4, offset = 0x4, fixed_abs, tag = 'smem constant byte address 0x4 - core index']
  #allocation1 [shape = 'u32[144,128]{1,0:T(1,128)}', space=vmem, size = 0x12000, scoped, tag = 'internal scratch']
  %s0 = inlined_call_operand.vmem [shape: f32[2,3], index: 0, kind: input, shape index: {}]
  %s1 = inlined_call_operand.vmem [shape: f32[2,6,256], index: 1, kind: input, shape index: {}]
  %s2 = inlined_call_operand.vmem [shape: f32[3,144], index: 2, kind: input, shape index: {}]
  %s3 = inlined_call_operand.vmem [shape: f32[3,1], index: 3, kind: input, shape index: {}]
  %s4 = inlined_call_operand.vmem [shape: f32[2,3,256], index: 4, kind: output, shape index: {}]
  %s5 = sld [smem:[#allocation0]]
  $region30: #{tpu_custom_call.1} parent=0
    _
  %s7 = ssub.s32 1, %s5
  %s8 = scalar_select 0, %s7, %s5
  $region1: #{tpu_custom_call.1} parent=0
    #allocation2 [shape = 'u8[1024]{0}', space=smem, size = 0x400, scoped, tag = 'input window, operand 0, single buffered']
    #allocation3 [shape = 's32[1]{0}', space=sflag, size = 0x4, scoped, tag = 'scoped memory for tpu_custom_call.1']
    %9 = vsyncpa [#allocation3], 0
    // Predicated region
    $region2: #{tpu_custom_call.1} parent=1 // pred_check
      _
    $region3: #{tpu_custom_call.1} parent=1 // pred_check_branch
      %11 = sbr.rel (0) target = $region5
    $region4: #{tpu_custom_call.1} parent=1 // pred_region
      %s13 = ssub.s32 32, 32
      %14 = vsyncadd [#allocation3], %s13
      %s16 = sshll.u32 %s0, 4
      %s17 = int_to_ptr.vmem [resolvable:$true] %s16
      %19 = dma.vmem_to_smem %s17, 32, [#allocation2], [#allocation3]
    $region5: #{tpu_custom_call.1} parent=1 // pred_fallthru
      _
    // Predicated region
    $region6: #{tpu_custom_call.1} parent=1 // pred_check
      _
    $region7: #{tpu_custom_call.1} parent=1 // pred_check_branch
      %21 = sbr.rel (0) target = $region9
    $region8: #{tpu_custom_call.1} parent=1 // pred_region
      _
    $region9: #{tpu_custom_call.1} parent=1 // pred_fallthru
      _
    // Predicated region
    $region10: #{tpu_custom_call.1} parent=1 // pred_check
      _
    $region11: #{tpu_custom_call.1} parent=1 // pred_check_branch
      %23 = sbr.rel (0) target = $region13
    $region12: #{tpu_custom_call.1} parent=1 // pred_region
      _
    $region13: #{tpu_custom_call.1} parent=1 // pred_fallthru
      _
    // Predicated region
    $region14: #{tpu_custom_call.1} parent=1 // pred_check
      _
    $region15: #{tpu_custom_call.1} parent=1 // pred_check_branch
      %25 = sbr.rel (0) target = $region17
    $region16: #{tpu_custom_call.1} parent=1 // pred_region
      _
    $region17: #{tpu_custom_call.1} parent=1 // pred_fallthru
      _
    // Predicated region
    $region18: #{tpu_custom_call.1} parent=1 // pred_check
      _
    $region19: #{tpu_custom_call.1} parent=1 // pred_check_branch
      %27 = sbr.rel (0) target = $region21
    $region20: #{tpu_custom_call.1} parent=1 // pred_region
      %28 = dma.done [#allocation3], 32
    $region21: #{tpu_custom_call.1} parent=1 // pred_fallthru
      _
    %29 = sfence
    %v30 = vlaneseq
    %v31 = vand.u32 %v30, 127
    %v32 = vadd.s32 %v31, 128
    %v33 = vadd.s32 %v31, 256
    %v34 = vadd.s32 %v31, 384
    %vm35 = vcmp.lt.s32.totalorder %v31, 0
    %v36 = vsub.s32 0, %v31
    %v37 = vsel %vm35, %v36, %v31
    %v38 = vshrl.u32 %v37, 8
    %v39 = vand.u32 %v37, 255
    %v40 = vsub.s32 0, %v39
    %v41 = vsel %vm35, %v40, %v39
    %vm42 = vcmp.lt.s32.totalorder %v32, 0
    %v43 = vsub.s32 0, %v32
    %v44 = vsel %vm42, %v43, %v32
    %v45 = vshrl.u32 %v44, 8
    %v46 = vand.u32 %v44, 255
    %v47 = vsub.s32 0, %v46
    %v48 = vsel %vm42, %v47, %v46
    %vm49 = vcmp.lt.s32.totalorder %v33, 0
    %v50 = vsub.s32 0, %v33
    %v51 = vsel %vm49, %v50, %v33
    %v52 = vshrl.u32 %v51, 8
    %v53 = vand.u32 %v51, 255
    %v54 = vsub.s32 0, %v53
    %v55 = vsel %vm49, %v54, %v53
    %vm56 = vcmp.lt.s32.totalorder %v34, 0
    %v57 = vsub.s32 0, %v34
    %v58 = vsel %vm56, %v57, %v34
    %v59 = vshrl.u32 %v58, 8
    %v60 = vand.u32 %v58, 255
    %v61 = vsub.s32 0, %v60
    %v62 = vsel %vm56, %v61, %v60
    %vm63 = vcmp.ne.s32.totalorder %v41, 0
    %vm64 = vcmp.ne.s32.totalorder %v48, 0
    %vm65 = vcmp.ne.s32.totalorder %v55, 0
    %vm66 = vcmp.ne.s32.totalorder %v62, 0
    %vm67 = vcmp.lt.s32.totalorder %v41, 0
    %vm68 = vcmp.lt.s32.totalorder %v48, 0
    %vm69 = vcmp.lt.s32.totalorder %v55, 0
    %vm70 = vcmp.lt.s32.totalorder %v62, 0
    %vm71 = vmand %vm67, %vm63
    %vm72 = vmand %vm68, %vm64
    %vm73 = vmand %vm69, %vm65
    %vm74 = vmand %vm70, %vm66
    %v75 = vadd.s32 %v41, 256
    %v76 = vadd.s32 %v48, 256
    %v77 = vadd.s32 %v55, 256
    %v78 = vadd.s32 %v62, 256
    %v79 = vsel %vm71, %v75, %v41
    %v80 = vsel %vm72, %v76, %v48
    %v81 = vsel %vm73, %v77, %v55
    %v82 = vsel %vm74, %v78, %v62
    %vm83 = vcmp.lt.s32.totalorder %v31, 0
    %v84 = vsub.s32 0, %v31
    %v85 = vsel %vm83, %v84, %v31
    %v86 = vshrl.u32 %v85, 4
    %v87 = vand.u32 %v85, 15
    %v88 = vsub.s32 0, %v87
    %v89 = vsel %vm83, %v88, %v87
    %vm90 = vcmp.lt.s32.totalorder %v32, 0
    %v91 = vsub.s32 0, %v32
    %v92 = vsel %vm90, %v91, %v32
    %v93 = vshrl.u32 %v92, 4
    %v94 = vand.u32 %v92, 15
    %v95 = vsub.s32 0, %v94
    %v96 = vsel %vm90, %v95, %v94
    %vm97 = vcmp.lt.s32.totalorder %v33, 0
    %v98 = vsub.s32 0, %v33
    %v99 = vsel %vm97, %v98, %v33
    %v100 = vshrl.u32 %v99, 4
    %v101 = vand.u32 %v99, 15
    %v102 = vsub.s32 0, %v101
    %v103 = vsel %vm97, %v102, %v101
    %vm104 = vcmp.lt.s32.totalorder %v34, 0
    %v105 = vsub.s32 0, %v34
    %v106 = vsel %vm104, %v105, %v34
    %v107 = vshrl.u32 %v106, 4
    %v108 = vand.u32 %v106, 15
    %v109 = vsub.s32 0, %v108
    %v110 = vsel %vm104, %v109, %v108
    %vm111 = vcmp.ne.s32.totalorder %v89, 0
    %vm112 = vcmp.ne.s32.totalorder %v96, 0
    %vm113 = vcmp.ne.s32.totalorder %v103, 0
    %vm114 = vcmp.ne.s32.totalorder %v110, 0
    %vm115 = vcmp.lt.s32.totalorder %v89, 0
    %vm116 = vcmp.lt.s32.totalorder %v96, 0
    %vm117 = vcmp.lt.s32.totalorder %v103, 0
    %vm118 = vcmp.lt.s32.totalorder %v110, 0
    %vm119 = vmand %vm115, %vm111
    %vm120 = vmand %vm116, %vm112
    %vm121 = vmand %vm117, %vm113
    %vm122 = vmand %vm118, %vm114
    %v123 = vadd.s32 %v89, 16
    %v124 = vadd.s32 %v96, 16
    %v125 = vadd.s32 %v103, 16
    %v126 = vadd.s32 %v110, 16
    %v127 = vsel %vm119, %v123, %v89
    %v128 = vsel %vm120, %v124, %v96
    %v129 = vsel %vm121, %v125, %v103
    %v130 = vsel %vm122, %v126, %v110
    %vm131 = vcmp.ge.s32.totalorder %v79, 16
    %vm132 = vcmp.ge.s32.totalorder %v80, 16
    %vm133 = vcmp.ge.s32.totalorder %v81, 16
    %vm134 = vcmp.ge.s32.totalorder %v82, 16
    %vm135 = vcmp.lt.s32.totalorder %v79, 240
    %vm136 = vcmp.lt.s32.totalorder %v80, 240
    %vm137 = vcmp.lt.s32.totalorder %v81, 240
    %vm138 = vcmp.lt.s32.totalorder %v82, 240
    %vm139 = vcmp.ge.s32.totalorder %v127, 1
    %vm140 = vcmp.ge.s32.totalorder %v128, 1
    %vm141 = vcmp.ge.s32.totalorder %v129, 1
    %vm142 = vcmp.ge.s32.totalorder %v130, 1
    %vm143 = vcmp.lt.s32.totalorder %v127, 15
    %vm144 = vcmp.lt.s32.totalorder %v128, 15
    %vm145 = vcmp.lt.s32.totalorder %v129, 15
    %vm146 = vcmp.lt.s32.totalorder %v130, 15
    %v147 = vld [vmem:[%s1] sm:$0x3f]
    %v148 = vld [vmem:[%s1 + $0x8] sm:$0x3f]
    %151 = vrot.lane.b32.xlu0 %v147, 16
    %v152 = vpop.permute.xlu0 %151
    %153 = vrot.lane.b32.xlu0 %v148, 16
    %v154 = vpop.permute.xlu0 %153
    %vm155 = vcmask 130048
    %v156 = vsel %vm155, %v152, %v154
    %v159 = vsub.f32 %v147, %v152
    %v160 = vsub.f32 %v148, %v156
    %163 = vrot.lane.b32.xlu0 %v159, 112
    %v164 = vpop.permute.xlu0 %163
    %165 = vrot.lane.b32.xlu0 %v160, 112
    %v166 = vpop.permute.xlu0 %165
    %vm167 = vcmask 916480
    %v168 = vsel %vm167, %v164, %v166
    %v171 = vsel %vm167, %v166, 0.0
    %172 = vrot.lane.b32.xlu0 %v147, 1
    %v173 = vpop.permute.xlu0 %172
    %174 = vrot.lane.b32.xlu0 %v148, 1
    %v175 = vpop.permute.xlu0 %174
    %vm176 = vcmask 7168
    %v177 = vsel %vm176, %v173, %v175
    %v180 = vsub.f32 %v147, %v173
    %v181 = vsub.f32 %v148, %v177
    %184 = vrot.lane.b32.xlu0 %v180, 127
    %v185 = vpop.permute.xlu0 %184
    %186 = vrot.lane.b32.xlu0 %v181, 127
    %v187 = vpop.permute.xlu0 %186
    %vm188 = vcmask 1039360
    %v189 = vsel %vm188, %v185, %v187
    %v192 = vsel %vm188, %v187, 0.0
    %v193 = vsel %vm143, 1, 0
    %v194 = vsel %vm144, 1, 0
    %vm195 = vcmp.eq.s32.totalorder %v193, 1
    %vm196 = vcmp.eq.s32.totalorder %v194, 1
    %v197 = vsel %vm195, %v189, 0.0
    %v198 = vsel %vm196, %v192, 0.0
    %s199 = sld [smem:[#allocation2]]
    %v200 = vstv %s199
    %s201 = sld [smem:[#allocation2 + $0x1]]
    %v202 = vstv %s201
    %s203 = sld [smem:[#allocation2 + $0x2]]
    %v204 = vstv %s203
    %v207 = vrot.slane %v197, 2
    %v208 = vrot.slane %v198, 2
    %vm211 = vcmask 1045504
    %v212 = vsel %vm211, %v168, %v207
    %v213 = vsel %vm211, %v171, %v208
    %vm214 = vcmask 1043456
    %v215 = vsel %vm214, %v207, %v200
    %v216 = vsel %vm214, %v208, %v200
    %vm217 = vcmask 1044480
    %v218 = vsel %vm217, %v215, %v202
    %v219 = vsel %vm217, %v216, %v202
    %v220 = vsel %vm211, %v218, %v204
    %v221 = vsel %vm211, %v219, %v204
    %vm222 = vcmask 1046528
    %v223 = vsel %vm222, %v220, 0.0
    %v224 = vsel %vm222, %v221, 0.0
    %s225 = scalar_lea.vmem %s1, 16
    %v226 = vld [vmem:[%s225] sm:$0x3f]
    %v227 = vld [vmem:[%s225 + $0x8] sm:$0x3f]
    %230 = vrot.lane.b32.xlu0 %v226, 16
    %v231 = vpop.permute.xlu0 %230
    %232 = vrot.lane.b32.xlu0 %v227, 16
    %v233 = vpop.permute.xlu0 %232
    %v234 = vsel %vm155, %v231, %v233
    %v237 = vsub.f32 %v226, %v231
    %v238 = vsub.f32 %v227, %v234
    %241 = vrot.lane.b32.xlu0 %v237, 112
    %v242 = vpop.permute.xlu0 %241
    %243 = vrot.lane.b32.xlu0 %v238, 112
    %v244 = vpop.permute.xlu0 %243
    %v245 = vsel %vm167, %v242, %v244
    %v248 = vsel %vm167, %v244, 0.0
    %249 = vrot.lane.b32.xlu0 %v226, 1
    %v250 = vpop.permute.xlu0 %249
    %251 = vrot.lane.b32.xlu0 %v227, 1
    %v252 = vpop.permute.xlu0 %251
    %v253 = vsel %vm176, %v250, %v252
    %v256 = vsub.f32 %v226, %v250
    %v257 = vsub.f32 %v227, %v253
    %260 = vrot.lane.b32.xlu0 %v256, 127
    %v261 = vpop.permute.xlu0 %260
    %262 = vrot.lane.b32.xlu0 %v257, 127
    %v263 = vpop.permute.xlu0 %262
    %v264 = vsel %vm188, %v261, %v263
    %v267 = vsel %vm188, %v263, 0.0
    %v268 = vsel %vm195, %v264, 0.0
    %v269 = vsel %vm196, %v267, 0.0
    %s270 = sld [smem:[#allocation2 + $0x80]]
    %v271 = vstv %s270
    %s272 = sld [smem:[#allocation2 + $0x81]]
    %v273 = vstv %s272
    %s274 = sld [smem:[#allocation2 + $0x82]]
    %v275 = vstv %s274
    %v278 = vrot.slane %v268, 2
    %v279 = vrot.slane %v269, 2
    %v282 = vsel %vm211, %v245, %v278
    %v283 = vsel %vm211, %v248, %v279
    %v284 = vsel %vm214, %v278, %v271
    %v285 = vsel %vm214, %v279, %v271
    %v286 = vsel %vm217, %v284, %v273
    %v287 = vsel %vm217, %v285, %v273
    %v288 = vsel %vm211, %v286, %v275
    %v289 = vsel %vm211, %v287, %v275
    %v290 = vsel %vm222, %v288, 0.0
    %v291 = vsel %vm222, %v289, 0.0
    %300 = vrot.lane.b32.xlu0 %v212, 17
    %v301 = vpop.permute.xlu0 %300
    %302 = vrot.lane.b32.xlu0 %v213, 17
    %v303 = vpop.permute.xlu0 %302
    %304 = vrot.lane.b32.xlu0 %v282, 17
    %v305 = vpop.permute.xlu0 %304
    %306 = vrot.lane.b32.xlu0 %v283, 17
    %v307 = vpop.permute.xlu0 %306
    %308 = vrot.lane.b32.xlu0 %v223, 17
    %v309 = vpop.permute.xlu0 %308
    %310 = vrot.lane.b32.xlu0 %v224, 17
    %v311 = vpop.permute.xlu0 %310
    %312 = vrot.lane.b32.xlu0 %v290, 17
    %v313 = vpop.permute.xlu0 %312
    %314 = vrot.lane.b32.xlu0 %v291, 17
    %v315 = vpop.permute.xlu0 %314
    %vm316 = vcmask 138240
    %v317 = vsel %vm316, %v301, %v303
    %v318 = vsel %vm316, %v303, %v305
    %v319 = vsel %vm316, %v305, %v307
    %v320 = vsel %vm316, %v309, %v311
    %v321 = vsel %vm316, %v311, %v313
    %v322 = vsel %vm316, %v313, %v315
    %v333 = vsel %vm316, 0.0, %v301
    %v334 = vsel %vm316, 0.0, %v309
    %v335 = vsel %vm316, %v307, 0.0
    %v336 = vsel %vm316, %v315, 0.0
    %vm337 = vmand %vm131, %vm139
    %vm338 = vmand %vm132, %vm140
    %vm339 = vmand %vm133, %vm141
    %vm340 = vmand %vm134, %vm142
    %v341 = vsel %vm337, 1, 0
    %v342 = vsel %vm338, 1, 0
    %v343 = vsel %vm339, 1, 0
    %v344 = vsel %vm340, 1, 0
    %vm345 = vcmp.eq.s32.totalorder %v341, 1
    %vm346 = vcmp.eq.s32.totalorder %v342, 1
    %vm347 = vcmp.eq.s32.totalorder %v343, 1
    %vm348 = vcmp.eq.s32.totalorder %v344, 1
    %v349 = vsel %vm345, %v333, 0.0
    %v350 = vsel %vm346, %v317, 0.0
    %v351 = vsel %vm347, %v318, 0.0
    %v352 = vsel %vm348, %v319, 0.0
    %v353 = vsel %vm345, %v334, 0.0
    %v354 = vsel %vm346, %v320, 0.0
    %v355 = vsel %vm347, %v321, 0.0
    %v356 = vsel %vm348, %v322, 0.0
    %v357 = vsel %vm131, 1, 0
    %v358 = vsel %vm132, 1, 0
    %v359 = vsel %vm133, 1, 0
    %v360 = vsel %vm134, 1, 0
    %vm361 = vcmp.eq.s32.totalorder %v357, 1
    %vm362 = vcmp.eq.s32.totalorder %v358, 1
    %vm363 = vcmp.eq.s32.totalorder %v359, 1
    %vm364 = vcmp.eq.s32.totalorder %v360, 1
    %369 = vrot.lane.b32.xlu0 %v333, 127
    %v370 = vpop.permute.xlu0 %369
    %371 = vrot.lane.b32.xlu0 %v317, 127
    %v372 = vpop.permute.xlu0 %371
    %373 = vrot.lane.b32.xlu0 %v318, 127
    %v374 = vpop.permute.xlu0 %373
    %375 = vrot.lane.b32.xlu0 %v319, 127
    %v376 = vpop.permute.xlu0 %375
    %377 = vrot.lane.b32.xlu0 %v335, 127
    %v378 = vpop.permute.xlu0 %377
    %379 = vrot.lane.b32.xlu0 %v334, 127
    %v380 = vpop.permute.xlu0 %379
    %381 = vrot.lane.b32.xlu0 %v320, 127
    %v382 = vpop.permute.xlu0 %381
    %383 = vrot.lane.b32.xlu0 %v321, 127
    %v384 = vpop.permute.xlu0 %383
    %385 = vrot.lane.b32.xlu0 %v322, 127
    %v386 = vpop.permute.xlu0 %385
    %387 = vrot.lane.b32.xlu0 %v336, 127
    %v388 = vpop.permute.xlu0 %387
    %v389 = vsel %vm188, %v370, %v372
    %v390 = vsel %vm188, %v372, %v374
    %v391 = vsel %vm188, %v374, %v376
    %v392 = vsel %vm188, %v376, %v378
    %v393 = vsel %vm188, %v380, %v382
    %v394 = vsel %vm188, %v382, %v384
    %v395 = vsel %vm188, %v384, %v386
    %v396 = vsel %vm188, %v386, %v388
    %v405 = vsel %vm361, %v389, 0.0
    %v406 = vsel %vm362, %v390, 0.0
    %v407 = vsel %vm363, %v391, 0.0
    %v408 = vsel %vm364, %v392, 0.0
    %v409 = vsel %vm361, %v393, 0.0
    %v410 = vsel %vm362, %v394, 0.0
    %v411 = vsel %vm363, %v395, 0.0
    %v412 = vsel %vm364, %v396, 0.0
    %vm413 = vmand %vm131, %vm143
    %vm414 = vmand %vm132, %vm144
    %vm415 = vmand %vm133, %vm145
    %vm416 = vmand %vm134, %vm146
    %v417 = vsel %vm413, 1, 0
    %v418 = vsel %vm414, 1, 0
    %v419 = vsel %vm415, 1, 0
    %v420 = vsel %vm416, 1, 0
    %vm421 = vcmp.eq.s32.totalorder %v417, 1
    %vm422 = vcmp.eq.s32.totalorder %v418, 1
    %vm423 = vcmp.eq.s32.totalorder %v419, 1
    %vm424 = vcmp.eq.s32.totalorder %v420, 1
    %425 = vrot.lane.b32.xlu0 %v333, 126
    %v426 = vpop.permute.xlu0 %425
    %427 = vrot.lane.b32.xlu0 %v317, 126
    %v428 = vpop.permute.xlu0 %427
    %429 = vrot.lane.b32.xlu0 %v318, 126
    %v430 = vpop.permute.xlu0 %429
    %431 = vrot.lane.b32.xlu0 %v319, 126
    %v432 = vpop.permute.xlu0 %431
    %433 = vrot.lane.b32.xlu0 %v335, 126
    %v434 = vpop.permute.xlu0 %433
    %435 = vrot.lane.b32.xlu0 %v334, 126
    %v436 = vpop.permute.xlu0 %435
    %437 = vrot.lane.b32.xlu0 %v320, 126
    %v438 = vpop.permute.xlu0 %437
    %439 = vrot.lane.b32.xlu0 %v321, 126
    %v440 = vpop.permute.xlu0 %439
    %441 = vrot.lane.b32.xlu0 %v322, 126
    %v442 = vpop.permute.xlu0 %441
    %443 = vrot.lane.b32.xlu0 %v336, 126
    %v444 = vpop.permute.xlu0 %443
    %vm445 = vcmask 1031168
    %v446 = vsel %vm445, %v426, %v428
    %v447 = vsel %vm445, %v428, %v430
    %v448 = vsel %vm445, %v430, %v432
    %v449 = vsel %vm445, %v432, %v434
    %v450 = vsel %vm445, %v436, %v438
    %v451 = vsel %vm445, %v438, %v440
    %v452 = vsel %vm445, %v440, %v442
    %v453 = vsel %vm445, %v442, %v444
    %v462 = vsel %vm421, %v446, 0.0
    %v463 = vsel %vm422, %v447, 0.0
    %v464 = vsel %vm423, %v448, 0.0
    %v465 = vsel %vm424, %v449, 0.0
    %v466 = vsel %vm421, %v450, 0.0
    %v467 = vsel %vm422, %v451, 0.0
    %v468 = vsel %vm423, %v452, 0.0
    %v469 = vsel %vm424, %v453, 0.0
    %v470 = vsel %vm139, 1, 0
    %v471 = vsel %vm140, 1, 0
    %v472 = vsel %vm141, 1, 0
    %v473 = vsel %vm142, 1, 0
    %vm474 = vcmp.eq.s32.totalorder %v470, 1
    %vm475 = vcmp.eq.s32.totalorder %v471, 1
    %vm476 = vcmp.eq.s32.totalorder %v472, 1
    %vm477 = vcmp.eq.s32.totalorder %v473, 1
    %478 = vrot.lane.b32.xlu0 %v333, 112
    %v479 = vpop.permute.xlu0 %478
    %480 = vrot.lane.b32.xlu0 %v317, 112
    %v481 = vpop.permute.xlu0 %480
    %482 = vrot.lane.b32.xlu0 %v318, 112
    %v483 = vpop.permute.xlu0 %482
    %484 = vrot.lane.b32.xlu0 %v319, 112
    %v485 = vpop.permute.xlu0 %484
    %486 = vrot.lane.b32.xlu0 %v335, 112
    %v487 = vpop.permute.xlu0 %486
    %488 = vrot.lane.b32.xlu0 %v334, 112
    %v489 = vpop.permute.xlu0 %488
    %490 = vrot.lane.b32.xlu0 %v320, 112
    %v491 = vpop.permute.xlu0 %490
    %492 = vrot.lane.b32.xlu0 %v321, 112
    %v493 = vpop.permute.xlu0 %492
    %494 = vrot.lane.b32.xlu0 %v322, 112
    %v495 = vpop.permute.xlu0 %494
    %496 = vrot.lane.b32.xlu0 %v336, 112
    %v497 = vpop.permute.xlu0 %496
    %v498 = vsel %vm167, %v479, %v481
    %v499 = vsel %vm167, %v481, %v483
    %v500 = vsel %vm167, %v483, %v485
    %v501 = vsel %vm167, %v485, %v487
    %v502 = vsel %vm167, %v489, %v491
    %v503 = vsel %vm167, %v491, %v493
    %v504 = vsel %vm167, %v493, %v495
    %v505 = vsel %vm167, %v495, %v497
    %v514 = vsel %vm474, %v498, 0.0
    %v515 = vsel %vm475, %v499, 0.0
    %v516 = vsel %vm476, %v500, 0.0
    %v517 = vsel %vm477, %v501, 0.0
    %v518 = vsel %vm474, %v502, 0.0
    %v519 = vsel %vm475, %v503, 0.0
    %v520 = vsel %vm476, %v504, 0.0
    %v521 = vsel %vm477, %v505, 0.0
    %v522 = vsel %vm145, 1, 0
    %v523 = vsel %vm146, 1, 0
    %vm524 = vcmp.eq.s32.totalorder %v522, 1
    %vm525 = vcmp.eq.s32.totalorder %v523, 1
    %526 = vrot.lane.b32.xlu0 %v333, 110
    %v527 = vpop.permute.xlu0 %526
    %528 = vrot.lane.b32.xlu0 %v317, 110
    %v529 = vpop.permute.xlu0 %528
    %530 = vrot.lane.b32.xlu0 %v318, 110
    %v531 = vpop.permute.xlu0 %530
    %532 = vrot.lane.b32.xlu0 %v319, 110
    %v533 = vpop.permute.xlu0 %532
    %534 = vrot.lane.b32.xlu0 %v335, 110
    %v535 = vpop.permute.xlu0 %534
    %536 = vrot.lane.b32.xlu0 %v334, 110
    %v537 = vpop.permute.xlu0 %536
    %538 = vrot.lane.b32.xlu0 %v320, 110
    %v539 = vpop.permute.xlu0 %538
    %540 = vrot.lane.b32.xlu0 %v321, 110
    %v541 = vpop.permute.xlu0 %540
    %542 = vrot.lane.b32.xlu0 %v322, 110
    %v543 = vpop.permute.xlu0 %542
    %544 = vrot.lane.b32.xlu0 %v336, 110
    %v545 = vpop.permute.xlu0 %544
    %vm546 = vcmask 900096
    %v547 = vsel %vm546, %v527, %v529
    %v548 = vsel %vm546, %v529, %v531
    %v549 = vsel %vm546, %v531, %v533
    %v550 = vsel %vm546, %v533, %v535
    %v551 = vsel %vm546, %v537, %v539
    %v552 = vsel %vm546, %v539, %v541
    %v553 = vsel %vm546, %v541, %v543
    %v554 = vsel %vm546, %v543, %v545
    %v563 = vsel %vm195, %v547, 0.0
    %v564 = vsel %vm196, %v548, 0.0
    %v565 = vsel %vm524, %v549, 0.0
    %v566 = vsel %vm525, %v550, 0.0
    %v567 = vsel %vm195, %v551, 0.0
    %v568 = vsel %vm196, %v552, 0.0
    %v569 = vsel %vm524, %v553, 0.0
    %v570 = vsel %vm525, %v554, 0.0
    %vm571 = vmand %vm135, %vm139
    %vm572 = vmand %vm136, %vm140
    %vm573 = vmand %vm137, %vm141
    %vm574 = vmand %vm138, %vm142
    %v575 = vsel %vm571, 1, 0
    %v576 = vsel %vm572, 1, 0
    %v577 = vsel %vm573, 1, 0
    %v578 = vsel %vm574, 1, 0
    %vm579 = vcmp.eq.s32.totalorder %v575, 1
    %vm580 = vcmp.eq.s32.totalorder %v576, 1
    %vm581 = vcmp.eq.s32.totalorder %v577, 1
    %vm582 = vcmp.eq.s32.totalorder %v578, 1
    %583 = vrot.lane.b32.xlu0 %v333, 96
    %v584 = vpop.permute.xlu0 %583
    %585 = vrot.lane.b32.xlu0 %v317, 96
    %v586 = vpop.permute.xlu0 %585
    %587 = vrot.lane.b32.xlu0 %v318, 96
    %v588 = vpop.permute.xlu0 %587
    %589 = vrot.lane.b32.xlu0 %v319, 96
    %v590 = vpop.permute.xlu0 %589
    %591 = vrot.lane.b32.xlu0 %v335, 96
    %v592 = vpop.permute.xlu0 %591
    %593 = vrot.lane.b32.xlu0 %v334, 96
    %v594 = vpop.permute.xlu0 %593
    %595 = vrot.lane.b32.xlu0 %v320, 96
    %v596 = vpop.permute.xlu0 %595
    %597 = vrot.lane.b32.xlu0 %v321, 96
    %v598 = vpop.permute.xlu0 %597
    %599 = vrot.lane.b32.xlu0 %v322, 96
    %v600 = vpop.permute.xlu0 %599
    %601 = vrot.lane.b32.xlu0 %v336, 96
    %v602 = vpop.permute.xlu0 %601
    %vm603 = vcmask 785408
    %v604 = vsel %vm603, %v584, %v586
    %v605 = vsel %vm603, %v586, %v588
    %v606 = vsel %vm603, %v588, %v590
    %v607 = vsel %vm603, %v590, %v592
    %v608 = vsel %vm603, %v594, %v596
    %v609 = vsel %vm603, %v596, %v598
    %v610 = vsel %vm603, %v598, %v600
    %v611 = vsel %vm603, %v600, %v602
    %v620 = vsel %vm579, %v604, 0.0
    %v621 = vsel %vm580, %v605, 0.0
    %v622 = vsel %vm581, %v606, 0.0
    %v623 = vsel %vm582, %v607, 0.0
    %v624 = vsel %vm579, %v608, 0.0
    %v625 = vsel %vm580, %v609, 0.0
    %v626 = vsel %vm581, %v610, 0.0
    %v627 = vsel %vm582, %v611, 0.0
    %v628 = vsel %vm135, 1, 0
    %v629 = vsel %vm136, 1, 0
    %v630 = vsel %vm137, 1, 0
    %v631 = vsel %vm138, 1, 0
    %vm632 = vcmp.eq.s32.totalorder %v628, 1
    %vm633 = vcmp.eq.s32.totalorder %v629, 1
    %vm634 = vcmp.eq.s32.totalorder %v630, 1
    %vm635 = vcmp.eq.s32.totalorder %v631, 1
    %636 = vrot.lane.b32.xlu0 %v333, 95
    %v637 = vpop.permute.xlu0 %636
    %638 = vrot.lane.b32.xlu0 %v317, 95
    %v639 = vpop.permute.xlu0 %638
    %640 = vrot.lane.b32.xlu0 %v318, 95
    %v641 = vpop.permute.xlu0 %640
    %642 = vrot.lane.b32.xlu0 %v319, 95
    %v643 = vpop.permute.xlu0 %642
    %644 = vrot.lane.b32.xlu0 %v335, 95
    %v645 = vpop.permute.xlu0 %644
    %646 = vrot.lane.b32.xlu0 %v334, 95
    %v647 = vpop.permute.xlu0 %646
    %648 = vrot.lane.b32.xlu0 %v320, 95
    %v649 = vpop.permute.xlu0 %648
    %650 = vrot.lane.b32.xlu0 %v321, 95
    %v651 = vpop.permute.xlu0 %650
    %652 = vrot.lane.b32.xlu0 %v322, 95
    %v653 = vpop.permute.xlu0 %652
    %654 = vrot.lane.b32.xlu0 %v336, 95
    %v655 = vpop.permute.xlu0 %654
    %vm656 = vcmask 777216
    %v657 = vsel %vm656, %v637, %v639
    %v658 = vsel %vm656, %v639, %v641
    %v659 = vsel %vm656, %v641, %v643
    %v660 = vsel %vm656, %v643, %v645
    %v661 = vsel %vm656, %v647, %v649
    %v662 = vsel %vm656, %v649, %v651
    %v663 = vsel %vm656, %v651, %v653
    %v664 = vsel %vm656, %v653, %v655
    %v673 = vsel %vm632, %v657, 0.0
    %v674 = vsel %vm633, %v658, 0.0
    %v675 = vsel %vm634, %v659, 0.0
    %v676 = vsel %vm635, %v660, 0.0
    %v677 = vsel %vm632, %v661, 0.0
    %v678 = vsel %vm633, %v662, 0.0
    %v679 = vsel %vm634, %v663, 0.0
    %v680 = vsel %vm635, %v664, 0.0
    %vm681 = vmand %vm135, %vm143
    %vm682 = vmand %vm136, %vm144
    %vm683 = vmand %vm137, %vm145
    %vm684 = vmand %vm138, %vm146
    %v685 = vsel %vm681, 1, 0
    %v686 = vsel %vm682, 1, 0
    %v687 = vsel %vm683, 1, 0
    %v688 = vsel %vm684, 1, 0
    %vm689 = vcmp.eq.s32.totalorder %v685, 1
    %vm690 = vcmp.eq.s32.totalorder %v686, 1
    %vm691 = vcmp.eq.s32.totalorder %v687, 1
    %vm692 = vcmp.eq.s32.totalorder %v688, 1
    %693 = vrot.lane.b32.xlu0 %v333, 94
    %v694 = vpop.permute.xlu0 %693
    %695 = vrot.lane.b32.xlu0 %v317, 94
    %v696 = vpop.permute.xlu0 %695
    %697 = vrot.lane.b32.xlu0 %v318, 94
    %v698 = vpop.permute.xlu0 %697
    %699 = vrot.lane.b32.xlu0 %v319, 94
    %v700 = vpop.permute.xlu0 %699
    %701 = vrot.lane.b32.xlu0 %v335, 94
    %v702 = vpop.permute.xlu0 %701
    %703 = vrot.lane.b32.xlu0 %v334, 94
    %v704 = vpop.permute.xlu0 %703
    %705 = vrot.lane.b32.xlu0 %v320, 94
    %v706 = vpop.permute.xlu0 %705
    %707 = vrot.lane.b32.xlu0 %v321, 94
    %v708 = vpop.permute.xlu0 %707
    %709 = vrot.lane.b32.xlu0 %v322, 94
    %v710 = vpop.permute.xlu0 %709
    %711 = vrot.lane.b32.xlu0 %v336, 94
    %v712 = vpop.permute.xlu0 %711
    %vm713 = vcmask 769024
    %v714 = vsel %vm713, %v694, %v696
    %v715 = vsel %vm713, %v696, %v698
    %v716 = vsel %vm713, %v698, %v700
    %v717 = vsel %vm713, %v700, %v702
    %v718 = vsel %vm713, %v704, %v706
    %v719 = vsel %vm713, %v706, %v708
    %v720 = vsel %vm713, %v708, %v710
    %v721 = vsel %vm713, %v710, %v712
    %v730 = vsel %vm689, %v714, 0.0
    %v731 = vsel %vm690, %v715, 0.0
    %v732 = vsel %vm691, %v716, 0.0
    %v733 = vsel %vm692, %v717, 0.0
    %v734 = vsel %vm689, %v718, 0.0
    %v735 = vsel %vm690, %v719, 0.0
    %v736 = vsel %vm691, %v720, 0.0
    %v737 = vsel %vm692, %v721, 0.0
    %738 = vrot.lane.b32.xlu0 %v333, 111
    %v739 = vpop.permute.xlu0 %738
    %740 = vrot.lane.b32.xlu0 %v317, 111
    %v741 = vpop.permute.xlu0 %740
    %742 = vrot.lane.b32.xlu0 %v318, 111
    %v743 = vpop.permute.xlu0 %742
    %744 = vrot.lane.b32.xlu0 %v319, 111
    %v745 = vpop.permute.xlu0 %744
    %746 = vrot.lane.b32.xlu0 %v335, 111
    %v747 = vpop.permute.xlu0 %746
    %748 = vrot.lane.b32.xlu0 %v334, 111
    %v749 = vpop.permute.xlu0 %748
    %750 = vrot.lane.b32.xlu0 %v320, 111
    %v751 = vpop.permute.xlu0 %750
    %752 = vrot.lane.b32.xlu0 %v321, 111
    %v753 = vpop.permute.xlu0 %752
    %754 = vrot.lane.b32.xlu0 %v322, 111
    %v755 = vpop.permute.xlu0 %754
    %756 = vrot.lane.b32.xlu0 %v336, 111
    %v757 = vpop.permute.xlu0 %756
    %vm758 = vcmask 908288
    %v759 = vsel %vm758, %v739, %v741
    %v760 = vsel %vm758, %v741, %v743
    %v761 = vsel %vm758, %v743, %v745
    %v762 = vsel %vm758, %v745, %v747
    %v763 = vsel %vm758, %v749, %v751
    %v764 = vsel %vm758, %v751, %v753
    %v765 = vsel %vm758, %v753, %v755
    %v766 = vsel %vm758, %v755, %v757
    %v775 = vld [vmem:[%s2] sm:$0x77]
    %v776 = vld [vmem:[%s3] sm:$0x7]
    %778 = vset.pattern.permute.xlu0 0
    %779 = vperm.xlu0 %778, %v776
    %v780 = vpop.permute.xlu0 %779
    %v783 = vcombine.high %v775, %v775
    %v784 = vsel %vm155, %v783, 0
    %786 = vmatprep.subr.mxu0 %v350
    %787 = vmatpush1.msra.mxu0 %v349
    %788 = vmatprep.subr.mxu0 %v354
    %789 = vmatpush1.msra.mxu0 %v353
    %790 = vmatprep.subr.mxu0 %v406
    %791 = vmatpush1.msra.mxu0 %v405
    %792 = vmatprep.subr.mxu0 %v410
    %793 = vmatpush1.msra.mxu0 %v409
    %794 = vmatprep.subr.mxu0 %v463
    %795 = vmatpush1.msra.mxu0 %v462
    %796 = vmatprep.subr.mxu0 %v467
    %797 = vmatpush1.msra.mxu0 %v466
    %798 = vmatprep.subr.mxu0 %v515
    %799 = vmatpush1.msra.mxu0 %v514
    %800 = vmatprep.subr.mxu0 %v519
    %801 = vmatpush1.msra.mxu0 %v518
    %802 = vmatprep.subr.mxu0 %v760
    %803 = vmatpush1.msra.mxu0 %v759
    %804 = vmatprep.subr.mxu0 %v764
    %805 = vmatpush1.msra.mxu0 %v763
    %806 = vmatprep.subr.mxu0 %v564
    %807 = vmatpush1.msra.mxu0 %v563
    %808 = vmatprep.subr.mxu0 %v568
    %809 = vmatpush1.msra.mxu0 %v567
    %810 = vmatprep.subr.mxu0 %v621
    %811 = vmatpush1.msra.mxu0 %v620
    %812 = vmatprep.subr.mxu0 %v625
    %813 = vmatpush1.msra.mxu0 %v624
    %814 = vmatprep.subr.mxu0 %v674
    %815 = vmatpush1.msra.mxu0 %v673
    %816 = vmatprep.subr.mxu0 %v678
    %817 = vmatpush1.msra.mxu0 %v677
    %818 = vmatprep.subr.mxu0 %v731
    %819 = vmatpush1.msra.mxu0 %v730
    %820 = vmatprep.subr.mxu0 %v735
    %821 = vmatpush1.msra.mxu0 %v734
    %822 = vmatprep.subr.mxu0 0.0
    %823 = vmatpush1.msra.mxu0 0.0
    %824 = vmatprep.subr.mxu0 0.0
    %825 = vmatpush1.msra.mxu0 0.0
    %826 = vmatprep.subr.mxu0 0.0
    %827 = vmatpush1.msra.mxu0 0.0
    %828 = vmatprep.subr.mxu0 0.0
    %829 = vmatpush1.msra.mxu0 0.0
    %830 = vmatprep.subr.mxu0 0.0
    %831 = vmatpush1.msra.mxu0 0.0
    %832 = vmatprep.subr.mxu0 0.0
    %833 = vmatpush1.msra.mxu0 0.0
    %834 = vmatprep.subr.mxu0 0.0
    %835 = vmatpush1.msra.mxu0 0.0
    %836 = vmatprep.subr.mxu0 0.0
    %837 = vmatpush1.msra.mxu0 0.0
    %838 = vmatprep.subr.mxu0 0.0
    %839 = vmatpush1.msra.mxu0 0.0
    %840 = vmatprep.subr.mxu0 0.0
    %841 = vmatpush1.msra.mxu0 0.0
    %842 = vmatprep.subr.mxu0 0.0
    %843 = vmatpush1.msra.mxu0 0.0
    %844 = vmatprep.subr.mxu0 0.0
    %845 = vmatpush1.msra.mxu0 0.0
    %846 = vmatprep.subr.mxu0 0.0
    %847 = vmatpush1.msra.mxu0 0.0
    %848 = vmatprep.subr.mxu0 0.0
    %849 = vmatpush1.msra.mxu0 0.0
    %850 = vmatprep.mubr.f32.mxu0 %v784
    %851 = vmatmul.mubr.f32.gmra.mrb[0].mxu0 %v775
    %v852 = vpop.f32.mrb[0].mxu0
    %v853 = vadd.f32 %v780, %v852
    %v854 = vpop.f32.mrb[0].mxu0
    %v855 = vadd.f32 %v780, %v854
    %856 = vdwg.mxu0
    %857 = vmatprep.subr.mxu0 %v352
    %858 = vmatpush1.msra.mxu0 %v351
    %859 = vmatprep.subr.mxu0 %v356
    %860 = vmatpush1.msra.mxu0 %v355
    %861 = vmatprep.subr.mxu0 %v408
    %862 = vmatpush1.msra.mxu0 %v407
    %863 = vmatprep.subr.mxu0 %v412
    %864 = vmatpush1.msra.mxu0 %v411
    %865 = vmatprep.subr.mxu0 %v465
    %866 = vmatpush1.msra.mxu0 %v464
    %867 = vmatprep.subr.mxu0 %v469
    %868 = vmatpush1.msra.mxu0 %v468
    %869 = vmatprep.subr.mxu0 %v517
    %870 = vmatpush1.msra.mxu0 %v516
    %871 = vmatprep.subr.mxu0 %v521
    %872 = vmatpush1.msra.mxu0 %v520
    %873 = vmatprep.subr.mxu0 %v762
    %874 = vmatpush1.msra.mxu0 %v761
    %875 = vmatprep.subr.mxu0 %v766
    %876 = vmatpush1.msra.mxu0 %v765
    %877 = vmatprep.subr.mxu0 %v566
    %878 = vmatpush1.msra.mxu0 %v565
    %879 = vmatprep.subr.mxu0 %v570
    %880 = vmatpush1.msra.mxu0 %v569
    %881 = vmatprep.subr.mxu0 %v623
    %882 = vmatpush1.msra.mxu0 %v622
    %883 = vmatprep.subr.mxu0 %v627
    %884 = vmatpush1.msra.mxu0 %v626
    %885 = vmatprep.subr.mxu0 %v676
    %886 = vmatpush1.msra.mxu0 %v675
    %887 = vmatprep.subr.mxu0 %v680
    %888 = vmatpush1.msra.mxu0 %v679
    %889 = vmatprep.subr.mxu0 %v733
    %890 = vmatpush1.msra.mxu0 %v732
    %891 = vmatprep.subr.mxu0 %v737
    %892 = vmatpush1.msra.mxu0 %v736
    %893 = vmatprep.subr.mxu0 0.0
    %894 = vmatpush1.msra.mxu0 0.0
    %895 = vmatprep.subr.mxu0 0.0
    %896 = vmatpush1.msra.mxu0 0.0
    %897 = vmatprep.subr.mxu0 0.0
    %898 = vmatpush1.msra.mxu0 0.0
    %899 = vmatprep.subr.mxu0 0.0
    %900 = vmatpush1.msra.mxu0 0.0
    %901 = vmatprep.subr.mxu0 0.0
    %902 = vmatpush1.msra.mxu0 0.0
    %903 = vmatprep.subr.mxu0 0.0
    %904 = vmatpush1.msra.mxu0 0.0
    %905 = vmatprep.subr.mxu0 0.0
    %906 = vmatpush1.msra.mxu0 0.0
    %907 = vmatprep.subr.mxu0 0.0
    %908 = vmatpush1.msra.mxu0 0.0
    %909 = vmatprep.subr.mxu0 0.0
    %910 = vmatpush1.msra.mxu0 0.0
    %911 = vmatprep.subr.mxu0 0.0
    %912 = vmatpush1.msra.mxu0 0.0
    %913 = vmatprep.subr.mxu0 0.0
    %914 = vmatpush1.msra.mxu0 0.0
    %915 = vmatprep.subr.mxu0 0.0
    %916 = vmatpush1.msra.mxu0 0.0
    %917 = vmatprep.subr.mxu0 0.0
    %918 = vmatpush1.msra.mxu0 0.0
    %919 = vmatprep.subr.mxu0 0.0
    %920 = vmatpush1.msra.mxu0 0.0
    %921 = vmatprep.mubr.f32.mxu0 %v784
    %922 = vmatmul.mubr.f32.gmra.mrb[0].mxu0 %v775
    %v923 = vpop.f32.mrb[0].mxu0
    %v924 = vadd.f32 %v780, %v923
    %v925 = vpop.f32.mrb[0].mxu0
    %v926 = vadd.f32 %v780, %v925
    %927 = vdwg.mxu0
    %v928 = vmul.f32 %v853, 0.1
    %v929 = vmul.f32 %v855, 0.1
    %v930 = vmul.f32 %v924, 0.1
    %v931 = vmul.f32 %v926, 0.1
    %v932 = vtanh.pop %v928
    %v933 = vtanh.pop %v929
    %v934 = vtanh.pop %v930
    %v935 = vtanh.pop %v931
    %v936 = vmul.f32 %v932, 10.0
    %v937 = vmul.f32 %v933, 10.0
    %v938 = vmul.f32 %v934, 10.0
    %v939 = vmul.f32 %v935, 10.0
    %v942 = vcombine.low %v936, %v937
    %944 = vst [vmem:[%s4] sm:$0x77] %v942
    %v947 = vcombine.low %v938, %v939
    %s949 = scalar_lea.vmem %s4, 8
    %950 = vst [vmem:[%s949] sm:$0x77] %v947
    // Predicated region
    $region22: #{tpu_custom_call.1} parent=1 // pred_check
      _
    $region23: #{tpu_custom_call.1} parent=1 // pred_check_branch
      %952 = sbr.rel (0) target = $region25
    $region24: #{tpu_custom_call.1} parent=1 // pred_region
      _
    $region25: #{tpu_custom_call.1} parent=1 // pred_fallthru
      _
    // Predicated region
    $region26: #{tpu_custom_call.1} parent=1 // pred_check
      _
    $region27: #{tpu_custom_call.1} parent=1 // pred_check_branch
      %954 = sbr.rel (0) target = $region29
    $region28: #{tpu_custom_call.1} parent=1 // pred_region
      _
    $region29: #{tpu_custom_call.1} parent=1 // pred_fallthru
      _
    %955 = vsyncpa [#allocation3], 1

</llo_original>
